<compile_context>
chip_gen: v6e
topology: v6e:2x2x1
jax: 0.10.0
libtpu: 0.0.40
codegen_flags: <defaults>
</compile_context>

<pallas_src>
import functools

import jax
import jax.numpy as jnp
from jax import lax
from jax.experimental import pallas as pl
from jax.experimental.pallas import tpu as pltpu


def gcn_kernel(edge_dst_ref, edge_src_ref, batch_ref, x_ref,
               w1_ref, b1_ref, w2_ref, b2_ref, wl_ref, bl_ref,
               out_ref, *, compute_dtype):
    """One graph-batch per grid step; whole forward pass VMEM-resident.

      A+I        built from the self-loop-augmented edge list via one MXU matmul
      A_hat @ v  applied as  dis . ((A+I) @ (dis . v)),  dis = deg^{-1/2} (f32)
      h1  = relu((A_hat @ x)  @ W1 + b1)      # dropout = identity (eval)
      h2  = relu(A_hat @ (h1 @ W2) + b2)
      out = (P @ h2) @ W_lin + b_lin          # P = mean-pool matrix from `batch`
    """
    f32 = jnp.float32
    n = x_ref.shape[0]
    e = edge_dst_ref.shape[1]
    g = out_ref.shape[0]          # graphs padded to a multiple of 8 sublanes

    # ---- A + I from the edge list (self-loops already appended by wrapper) ------
    # onehot_dst is (N, E), onehot_src is built directly as (E, N) so the build
    # matmul is a standard contraction (no RHS transpose through the XLU).
    dst = edge_dst_ref[...]                                        # (1, E) int32
    src = edge_src_ref[...]                                        # (E, 1) int32
    oh_dst = (lax.broadcasted_iota(jnp.int32, (n, e), 0) == dst).astype(compute_dtype)
    oh_src = (lax.broadcasted_iota(jnp.int32, (e, n), 1) == src).astype(compute_dtype)
    # adj[i, j] = number of edges j -> i (duplicates summed, like PyG scatter-add).
    # 0/1 one-hots are exact in bf16 and accumulation is f32, so counts are exact.
    adj = jnp.dot(oh_dst, oh_src, preferred_element_type=f32)      # (N, N) f32
    # NOTE: counts are exact in bf16 only while (A+I)[i,j] <= 256 (heavy multigraphs
    # with >256 duplicate edges between one pair would round the MXU operand).
    adj_c = adj.astype(compute_dtype)

    # ---- degree normalization, kept in f32 (precision-critical) -----------------
    deg = jnp.sum(adj, axis=1, keepdims=True)                      # (N, 1)
    dis = jnp.where(deg > 0, lax.rsqrt(deg), 0.0)                  # D^{-1/2}, f32

    # ---- mean-pool matrix P (G_pad, N) -------------------------------------------
    onehot_g = (lax.broadcasted_iota(jnp.int32, (g, n), 0) == batch_ref[...]).astype(f32)
    counts = jnp.maximum(jnp.sum(onehot_g, axis=1, keepdims=True), 1.0)
    pool_c = (onehot_g / counts).astype(compute_dtype)

    # ---- conv1 + ReLU:  (A_hat @ x) @ W1  (input_dim < hidden -> cheaper order) --
    xs = (dis * x_ref[...].astype(f32)).astype(compute_dtype)      # d^{-1/2} . x
    ax = dis * jnp.dot(adj_c, xs, preferred_element_type=f32)      # A_hat @ x (f32)
    h = jnp.maximum(
        jnp.dot(ax.astype(compute_dtype), w1_ref[...], preferred_element_type=f32)
        + b1_ref[...], 0.0)
    # Dropout(p=0.3) is identity in eval mode.
    # TODO(synk): training-mode dropout (stochastic masking via pltpu.prng_*) not implemented.

    # ---- conv2 + ReLU ------------------------------------------------------------
    hw = jnp.dot(h.astype(compute_dtype), w2_ref[...], preferred_element_type=f32)
    hw = (dis * hw).astype(compute_dtype)                          # d^{-1/2} . (h W2)
    h2 = jnp.maximum(
        dis * jnp.dot(adj_c, hw, preferred_element_type=f32) + b2_ref[...], 0.0)

    # ---- global mean pool + Linear (classes lane-padded to 128) ------------------
    pooled = jnp.dot(pool_c, h2.astype(compute_dtype), preferred_element_type=f32)
    out_ref[...] = jnp.dot(pooled.astype(compute_dtype), wl_ref[...],
                           preferred_element_type=f32) + bl_ref[...]


@functools.partial(jax.jit, static_argnames=("num_graphs", "use_bf16"))
def simple_gcn_forward(x, edge_index, batch, params, num_graphs, use_bf16=True):
    """Batched forward: x (B,N,F), edge_index (B,2,E) raw (no self-loops), batch (B,N).

    One pallas_call with grid=(B,); per-graph-batch inputs are blocked on the leading
    axis, weights stay VMEM-resident (constant index_map).  Returns (B, num_graphs, 2).
    """
    w1, b1, w2, b2, wl, bl = params
    cdt = jnp.bfloat16 if use_bf16 else jnp.float32
    bsz, n, f_in = x.shape
    hidden = w1.shape[1]
    n_cls = wl.shape[1]

    # Fold self-loops into the edge list (GCNConv adds them); the MXU absorbs the
    # extra N columns of K and the kernel avoids two (N,N) iotas + compare + add.
    loops = jnp.arange(n, dtype=jnp.int32)
    loops = jnp.broadcast_to(jnp.stack([loops, loops])[None], (bsz, 2, n))
    ei = jnp.concatenate([edge_index.astype(jnp.int32), loops], axis=-1)   # (B,2,E+N)
    e_tot = ei.shape[-1]
    edge_src = ei[:, 0, :, None]      # (B, E+N, 1) column -> (E,N) one-hot (MXU-native RHS)
    edge_dst = ei[:, 1, None, :]      # (B, 1, E+N) row    -> (N,E) one-hot LHS

    batch2d = batch.astype(jnp.int32)[:, None, :]                          # (B, 1, N)

    # Lane-dense output: pad the class head to 128 lanes and graphs to 8 sublanes.
    g_pad = max(8, -(-num_graphs // 8) * 8)
    wl_pad = jnp.zeros((hidden, 128), wl.dtype).at[:, :n_cls].set(wl)
    bl_pad = jnp.zeros((1, 128), jnp.float32).at[:, :n_cls].set(
        bl.reshape(1, -1).astype(jnp.float32))

    # Weights are pure MXU operands -> cast in wrapper (halves their DMA in bf16);
    # x and the biases stay f32 (x is scaled by d^{-1/2} in f32 inside the kernel).
    w1_c, w2_c, wl_c = w1.astype(cdt), w2.astype(cdt), wl_pad.astype(cdt)
    x_f = x.astype(jnp.float32)
    b1_f = b1.reshape(1, -1).astype(jnp.float32)
    b2_f = b2.reshape(1, -1).astype(jnp.float32)

    per_b = lambda shape: pl.BlockSpec((None,) + shape, lambda b: (b, 0, 0))
    resident = lambda shape: pl.BlockSpec(shape, lambda b: (0, 0))

    out = pl.pallas_call(
        functools.partial(gcn_kernel, compute_dtype=cdt),
        grid=(bsz,),
        out_shape=jax.ShapeDtypeStruct((bsz, g_pad, 128), jnp.float32),
        in_specs=[
            per_b((1, e_tot)),          # edge_dst
            per_b((e_tot, 1)),          # edge_src
            per_b((1, n)),              # batch
            per_b((n, f_in)),           # x
            resident((f_in, hidden)),   # W1   (VMEM-resident across grid steps)
            resident((1, hidden)),      # b1
            resident((hidden, hidden)), # W2
            resident((1, hidden)),      # b2
            resident((hidden, 128)),    # W_lin (lane-padded)
            resident((1, 128)),         # b_lin (lane-padded)
        ],
        out_specs=per_b((g_pad, 128)),
        compiler_params=pltpu.CompilerParams(
            dimension_semantics=("parallel",),          # shards graph-batches across v7x TCs
            vmem_limit_bytes=32 * 1024 * 1024,          # raise scoped default (v5e is 16 MiB)
        ),
    )(edge_dst, edge_src, batch2d, x_f, w1_c, b1_f, w2_c, b2_f, wl_c, bl_pad)
    return out[:, :num_graphs, :n_cls]


def reference_forward(x, edge_index, batch, params, num_graphs):
    """Pure-JAX reference (eval-mode SimpleGCN), single graph-batch."""
    n = x.shape[0]
    src, dst = edge_index[0], edge_index[1]
    adj = jnp.zeros((n, n), jnp.float32).at[dst, src].add(1.0)   # sums multi-edges
    adj = adj + jnp.eye(n, dtype=jnp.float32)
    deg = jnp.sum(adj, axis=1)
    dis = jnp.where(deg > 0, jax.lax.rsqrt(deg), 0.0)
    a_hat = adj * dis[:, None] * dis[None, :]
    w1, b1, w2, b2, wl, bl = params
    h = jax.nn.relu(a_hat @ x @ w1 + b1)
    h = jax.nn.relu(a_hat @ (h @ w2) + b2)
    one_hot = (batch[None, :] == jnp.arange(num_graphs)[:, None]).astype(jnp.float32)
    pooled = (one_hot @ h) / jnp.maximum(one_hot.sum(1, keepdims=True), 1.0)
    return pooled @ wl + bl


if __name__ == "__main__":
    key = jax.random.PRNGKey(0)
    k_x, k_w1, k_w2, k_wl, k_b1, k_b2, k_bl = jax.random.split(key, 7)

    # Small problem: 4 graph-batches per call, 16 nodes each, 8 input features,
    # hidden 32, 2 graphs per batch.
    num_batches = 4
    num_nodes = 16
    input_dim = 8
    hidden_dim = 32
    num_graphs = 2

    x = jax.random.normal(k_x, (num_batches, num_nodes, input_dim), jnp.float32)

    # Deterministic edge sets: a bidirectional ring within each graph; odd batches
    # use stride-2 rings so the batches are not all identical.  (No self-loops here;
    # the wrapper/GCNConv adds them.)
    half = num_nodes // num_graphs
    edge_lists = []
    for bi in range(num_batches):
        step = 1 + (bi % 2)
        srcs, dsts = [], []
        for gi in range(num_graphs):
            base = gi * half
            for i in range(half):
                a = base + i
                b = base + (i + step) % half
                srcs += [a, b]
                dsts += [b, a]
        edge_lists.append([srcs, dsts])
    edge_index = jnp.array(edge_lists, dtype=jnp.int32)            # (B, 2, E)

    batch_vec = jnp.repeat(jnp.arange(num_graphs, dtype=jnp.int32), half)
    batch_all = jnp.broadcast_to(batch_vec, (num_batches, num_nodes))

    # Deterministic parameters (weights stored (in, out); biases 2-D).
    w1 = jax.random.normal(k_w1, (input_dim, hidden_dim), jnp.float32) * 0.1
    b1 = jax.random.normal(k_b1, (1, hidden_dim), jnp.float32) * 0.01
    w2 = jax.random.normal(k_w2, (hidden_dim, hidden_dim), jnp.float32) * 0.1
    b2 = jax.random.normal(k_b2, (1, hidden_dim), jnp.float32) * 0.01
    wl = jax.random.normal(k_wl, (hidden_dim, 2), jnp.float32) * 0.1
    bl = jax.random.normal(k_bl, (1, 2), jnp.float32) * 0.01
    params = (w1, b1, w2, b2, wl, bl)

    ref = jnp.stack([
        reference_forward(x[bi], edge_index[bi], batch_all[bi], params, num_graphs)
        for bi in range(num_batches)
    ])

    # f32 path: strict semantic check against the pure-JAX reference.
    out_f32 = jax.block_until_ready(
        simple_gcn_forward(x, edge_index, batch_all, params, num_graphs, use_bf16=False))
    assert out_f32.shape == (num_batches, num_graphs, 2)
    assert jnp.allclose(out_f32, ref, atol=1e-4, rtol=1e-4), (out_f32, ref)

    # bf16-MXU / f32-accumulate path (default production path on all generations).
    out_bf16 = jax.block_until_ready(
        simple_gcn_forward(x, edge_index, batch_all, params, num_graphs, use_bf16=True))
    assert out_bf16.shape == (num_batches, num_graphs, 2)
    assert jnp.allclose(out_bf16, ref, atol=2e-2, rtol=2e-2), (out_bf16, ref)

    print("KERNEL_OK")
</pallas_src>

<mosaic_0001>
module attributes {stable_mosaic.version = 11 : i64} {
  func.func @gcn_kernel(%arg0: i32, %arg1: memref<1x1x48xi32, #tpu.memory_space<vmem>>, %arg2: memref<1x48x1xi32, #tpu.memory_space<vmem>>, %arg3: memref<1x1x16xi32, #tpu.memory_space<vmem>>, %arg4: memref<1x16x8xf32, #tpu.memory_space<vmem>>, %arg5: memref<8x32xf32, #tpu.memory_space<vmem>>, %arg6: memref<1x32xf32, #tpu.memory_space<vmem>>, %arg7: memref<32x32xf32, #tpu.memory_space<vmem>>, %arg8: memref<1x32xf32, #tpu.memory_space<vmem>>, %arg9: memref<32x128xf32, #tpu.memory_space<vmem>>, %arg10: memref<1x128xf32, #tpu.memory_space<vmem>>, %arg11: memref<1x8x128xf32, #tpu.memory_space<vmem>>) attributes {dimension_semantics = [#tpu.dimension_semantics<parallel>], iteration_bounds = array<i64: 4>, scalar_prefetch = 0 : i64, scratch_operands = 0 : i64, tpu.core_type = #tpu.core_type<tc>, window_params = [{transform_indices = @transform_0, window_bounds = array<i64: 1, 1, 48>}, {transform_indices = @transform_1, window_bounds = array<i64: 1, 48, 1>}, {transform_indices = @transform_2, window_bounds = array<i64: 1, 1, 16>}, {transform_indices = @transform_3, window_bounds = array<i64: 1, 16, 8>}, {pipeline_mode = #tpu.pipeline_mode<synchronous>, transform_indices = @transform_4, window_bounds = array<i64: 8, 32>}, {pipeline_mode = #tpu.pipeline_mode<synchronous>, transform_indices = @transform_5, window_bounds = array<i64: 1, 32>}, {pipeline_mode = #tpu.pipeline_mode<synchronous>, transform_indices = @transform_6, window_bounds = array<i64: 32, 32>}, {pipeline_mode = #tpu.pipeline_mode<synchronous>, transform_indices = @transform_7, window_bounds = array<i64: 1, 32>}, {pipeline_mode = #tpu.pipeline_mode<synchronous>, transform_indices = @transform_8, window_bounds = array<i64: 32, 128>}, {pipeline_mode = #tpu.pipeline_mode<synchronous>, transform_indices = @transform_9, window_bounds = array<i64: 1, 128>}, {transform_indices = @transform_10, window_bounds = array<i64: 1, 8, 128>}]} {
    %c0 = arith.constant 0 : index
    %c0_0 = arith.constant 0 : index
    %c0_1 = arith.constant 0 : index
    %0 = vector.load %arg1[%c0, %c0_0, %c0_1] : memref<1x1x48xi32, #tpu.memory_space<vmem>>, vector<1x1x48xi32>
    %1 = vector.shape_cast %0 : vector<1x1x48xi32> to vector<1x48xi32>
    %c0_2 = arith.constant 0 : index
    %c0_3 = arith.constant 0 : index
    %c0_4 = arith.constant 0 : index
    %2 = vector.load %arg2[%c0_2, %c0_3, %c0_4] : memref<1x48x1xi32, #tpu.memory_space<vmem>>, vector<1x48x1xi32>
    %3 = vector.shape_cast %2 : vector<1x48x1xi32> to vector<48x1xi32>
    %4 = tpu.iota {dimensions = array<i32: 0>} : vector<16x48xi32>
    %5 = vector.broadcast %1 : vector<1x48xi32> to vector<16x48xi32>
    %6 = arith.cmpi eq, %4, %5 : vector<16x48xi32>
    %7 = arith.extui %6 : vector<16x48xi1> to vector<16x48xi32>
    %8 = arith.sitofp %7 : vector<16x48xi32> to vector<16x48xf32>
    %9 = tpu.iota {dimensions = array<i32: 1>} : vector<48x16xi32>
    %10 = vector.broadcast %3 : vector<48x1xi32> to vector<48x16xi32>
    %11 = arith.cmpi eq, %9, %10 : vector<48x16xi32>
    %12 = arith.extui %11 : vector<48x16xi1> to vector<48x16xi32>
    %13 = arith.sitofp %12 : vector<48x16xi32> to vector<48x16xf32>
    %cst = arith.constant dense<0.000000e+00> : vector<16x16xf32>
    %14 = tpu.matmul %8, %13, %cst {dimension_numbers = #tpu.dot_dimension_numbers<[1], [0], [0], [1], [0, 0, 1, 1], [], []>} : vector<16x48xf32>, vector<48x16xf32>, vector<16x16xf32> -> vector<16x16xf32>
    %cst_5 = arith.constant dense<0.000000e+00> : vector<16xf32>
    %15 = vector.multi_reduction <add>, %14, %cst_5 [1] : vector<16x16xf32> to vector<16xf32>
    %16 = vector.shape_cast %15 : vector<16xf32> to vector<16x1xf32>
    %cst_6 = arith.constant 0.000000e+00 : f32
    %17 = vector.broadcast %cst_6 : f32 to vector<16x1xf32>
    %18 = arith.cmpf ogt, %16, %17 : vector<16x1xf32>
    %19 = math.rsqrt %16 : vector<16x1xf32>
    %cst_7 = arith.constant 0.000000e+00 : f32
    %20 = vector.broadcast %cst_7 : f32 to vector<16x1xf32>
    %21 = arith.select %18, %19, %20 : vector<16x1xi1>, vector<16x1xf32>
    %22 = tpu.iota {dimensions = array<i32: 0>} : vector<8x16xi32>
    %c0_8 = arith.constant 0 : index
    %c0_9 = arith.constant 0 : index
    %c0_10 = arith.constant 0 : index
    %23 = vector.load %arg3[%c0_8, %c0_9, %c0_10] : memref<1x1x16xi32, #tpu.memory_space<vmem>>, vector<1x1x16xi32>
    %24 = vector.shape_cast %23 : vector<1x1x16xi32> to vector<1x16xi32>
    %25 = vector.broadcast %24 : vector<1x16xi32> to vector<8x16xi32>
    %26 = arith.cmpi eq, %22, %25 : vector<8x16xi32>
    %27 = arith.extui %26 : vector<8x16xi1> to vector<8x16xi32>
    %28 = arith.sitofp %27 : vector<8x16xi32> to vector<8x16xf32>
    %cst_11 = arith.constant dense<0.000000e+00> : vector<8xf32>
    %29 = vector.multi_reduction <add>, %28, %cst_11 [1] : vector<8x16xf32> to vector<8xf32>
    %30 = vector.shape_cast %29 : vector<8xf32> to vector<8x1xf32>
    %cst_12 = arith.constant 1.000000e+00 : f32
    %31 = vector.broadcast %cst_12 : f32 to vector<8x1xf32>
    %32 = arith.maximumf %30, %31 : vector<8x1xf32>
    %33 = vector.broadcast %32 : vector<8x1xf32> to vector<8x16xf32>
    %34 = arith.divf %28, %33 : vector<8x16xf32>
    %c0_13 = arith.constant 0 : index
    %c0_14 = arith.constant 0 : index
    %c0_15 = arith.constant 0 : index
    %35 = vector.load %arg4[%c0_13, %c0_14, %c0_15] : memref<1x16x8xf32, #tpu.memory_space<vmem>>, vector<1x16x8xf32>
    %36 = vector.shape_cast %35 : vector<1x16x8xf32> to vector<16x8xf32>
    %37 = vector.broadcast %21 : vector<16x1xf32> to vector<16x8xf32>
    %38 = arith.mulf %37, %36 : vector<16x8xf32>
    %cst_16 = arith.constant dense<0.000000e+00> : vector<16x8xf32>
    %39 = tpu.matmul %14, %38, %cst_16 {dimension_numbers = #tpu.dot_dimension_numbers<[1], [0], [0], [1], [0, 0, 1, 1], [], []>} : vector<16x16xf32>, vector<16x8xf32>, vector<16x8xf32> -> vector<16x8xf32>
    %40 = vector.broadcast %21 : vector<16x1xf32> to vector<16x8xf32>
    %41 = arith.mulf %40, %39 : vector<16x8xf32>
    %c0_17 = arith.constant 0 : index
    %c0_18 = arith.constant 0 : index
    %42 = vector.load %arg5[%c0_17, %c0_18] : memref<8x32xf32, #tpu.memory_space<vmem>>, vector<8x32xf32>
    %cst_19 = arith.constant dense<0.000000e+00> : vector<16x32xf32>
    %43 = tpu.matmul %41, %42, %cst_19 {dimension_numbers = #tpu.dot_dimension_numbers<[1], [0], [0], [1], [0, 0, 1, 1], [], []>} : vector<16x8xf32>, vector<8x32xf32>, vector<16x32xf32> -> vector<16x32xf32>
    %c0_20 = arith.constant 0 : index
    %c0_21 = arith.constant 0 : index
    %44 = vector.load %arg6[%c0_20, %c0_21] : memref<1x32xf32, #tpu.memory_space<vmem>>, vector<1x32xf32>
    %45 = vector.broadcast %44 : vector<1x32xf32> to vector<16x32xf32>
    %46 = arith.addf %43, %45 : vector<16x32xf32>
    %cst_22 = arith.constant 0.000000e+00 : f32
    %47 = vector.broadcast %cst_22 : f32 to vector<16x32xf32>
    %48 = arith.maximumf %46, %47 : vector<16x32xf32>
    %c0_23 = arith.constant 0 : index
    %c0_24 = arith.constant 0 : index
    %49 = vector.load %arg7[%c0_23, %c0_24] : memref<32x32xf32, #tpu.memory_space<vmem>>, vector<32x32xf32>
    %cst_25 = arith.constant dense<0.000000e+00> : vector<16x32xf32>
    %50 = tpu.matmul %48, %49, %cst_25 {dimension_numbers = #tpu.dot_dimension_numbers<[1], [0], [0], [1], [0, 0, 1, 1], [], []>} : vector<16x32xf32>, vector<32x32xf32>, vector<16x32xf32> -> vector<16x32xf32>
    %51 = vector.broadcast %21 : vector<16x1xf32> to vector<16x32xf32>
    %52 = arith.mulf %51, %50 : vector<16x32xf32>
    %cst_26 = arith.constant dense<0.000000e+00> : vector<16x32xf32>
    %53 = tpu.matmul %14, %52, %cst_26 {dimension_numbers = #tpu.dot_dimension_numbers<[1], [0], [0], [1], [0, 0, 1, 1], [], []>} : vector<16x16xf32>, vector<16x32xf32>, vector<16x32xf32> -> vector<16x32xf32>
    %54 = vector.broadcast %21 : vector<16x1xf32> to vector<16x32xf32>
    %55 = arith.mulf %54, %53 : vector<16x32xf32>
    %c0_27 = arith.constant 0 : index
    %c0_28 = arith.constant 0 : index
    %56 = vector.load %arg8[%c0_27, %c0_28] : memref<1x32xf32, #tpu.memory_space<vmem>>, vector<1x32xf32>
    %57 = vector.broadcast %56 : vector<1x32xf32> to vector<16x32xf32>
    %58 = arith.addf %55, %57 : vector<16x32xf32>
    %cst_29 = arith.constant 0.000000e+00 : f32
    %59 = vector.broadcast %cst_29 : f32 to vector<16x32xf32>
    %60 = arith.maximumf %58, %59 : vector<16x32xf32>
    %cst_30 = arith.constant dense<0.000000e+00> : vector<8x32xf32>
    %61 = tpu.matmul %34, %60, %cst_30 {dimension_numbers = #tpu.dot_dimension_numbers<[1], [0], [0], [1], [0, 0, 1, 1], [], []>} : vector<8x16xf32>, vector<16x32xf32>, vector<8x32xf32> -> vector<8x32xf32>
    %c0_31 = arith.constant 0 : index
    %c0_32 = arith.constant 0 : index
    %62 = vector.load %arg9[%c0_31, %c0_32] : memref<32x128xf32, #tpu.memory_space<vmem>>, vector<32x128xf32>
    %cst_33 = arith.constant dense<0.000000e+00> : vector<8x128xf32>
    %63 = tpu.matmul %61, %62, %cst_33 {dimension_numbers = #tpu.dot_dimension_numbers<[1], [0], [0], [1], [0, 0, 1, 1], [], []>} : vector<8x32xf32>, vector<32x128xf32>, vector<8x128xf32> -> vector<8x128xf32>
    %c0_34 = arith.constant 0 : index
    %c0_35 = arith.constant 0 : index
    %64 = vector.load %arg10[%c0_34, %c0_35] : memref<1x128xf32, #tpu.memory_space<vmem>>, vector<1x128xf32>
    %65 = vector.broadcast %64 : vector<1x128xf32> to vector<8x128xf32>
    %66 = arith.addf %63, %65 : vector<8x128xf32>
    %c0_36 = arith.constant 0 : index
    %c0_37 = arith.constant 0 : index
    %c0_38 = arith.constant 0 : index
    %67 = vector.load %arg11[%c0_36, %c0_37, %c0_38] : memref<1x8x128xf32, #tpu.memory_space<vmem>>, vector<1x8x128xf32>
    %68 = vector.shape_cast %67 : vector<1x8x128xf32> to vector<8x128xf32>
    %69 = vector.shape_cast %66 : vector<8x128xf32> to vector<1x8x128xf32>
    tpu.vector_store %arg11[%c0_36, %c0_37, %c0_38], %69 {strides = array<i32>} : memref<1x8x128xf32, #tpu.memory_space<vmem>>, vector<1x8x128xf32>,
    return
  }
  func.func @transform_0(%arg0: i32) -> (i32, i32, i32) {
    %c0_i32 = arith.constant 0 : i32
    %c0_i32_0 = arith.constant 0 : i32
    %c0_i32_1 = arith.constant 0 : i32
    return %arg0, %c0_i32, %c0_i32_0 : i32, i32, i32
  }
  func.func @transform_1(%arg0: i32) -> (i32, i32, i32) {
    %c0_i32 = arith.constant 0 : i32
    %c0_i32_0 = arith.constant 0 : i32
    %c0_i32_1 = arith.constant 0 : i32
    return %arg0, %c0_i32, %c0_i32_0 : i32, i32, i32
  }
  func.func @transform_2(%arg0: i32) -> (i32, i32, i32) {
    %c0_i32 = arith.constant 0 : i32
    %c0_i32_0 = arith.constant 0 : i32
    %c0_i32_1 = arith.constant 0 : i32
    return %arg0, %c0_i32, %c0_i32_0 : i32, i32, i32
  }
  func.func @transform_3(%arg0: i32) -> (i32, i32, i32) {
    %c0_i32 = arith.constant 0 : i32
    %c0_i32_0 = arith.constant 0 : i32
    %c0_i32_1 = arith.constant 0 : i32
    return %arg0, %c0_i32, %c0_i32_0 : i32, i32, i32
  }
  func.func @transform_4(%arg0: i32) -> (i32, i32) {
    %c0_i32 = arith.constant 0 : i32
    %c0_i32_0 = arith.constant 0 : i32
    %c0_i32_1 = arith.constant 0 : i32
    return %c0_i32, %c0_i32_0 : i32, i32
  }
  func.func @transform_5(%arg0: i32) -> (i32, i32) {
    %c0_i32 = arith.constant 0 : i32
    %c0_i32_0 = arith.constant 0 : i32
    %c0_i32_1 = arith.constant 0 : i32
    return %c0_i32, %c0_i32_0 : i32, i32
  }
  func.func @transform_6(%arg0: i32) -> (i32, i32) {
    %c0_i32 = arith.constant 0 : i32
    %c0_i32_0 = arith.constant 0 : i32
    %c0_i32_1 = arith.constant 0 : i32
    return %c0_i32, %c0_i32_0 : i32, i32
  }
  func.func @transform_7(%arg0: i32) -> (i32, i32) {
    %c0_i32 = arith.constant 0 : i32
    %c0_i32_0 = arith.constant 0 : i32
    %c0_i32_1 = arith.constant 0 : i32
    return %c0_i32, %c0_i32_0 : i32, i32
  }
  func.func @transform_8(%arg0: i32) -> (i32, i32) {
    %c0_i32 = arith.constant 0 : i32
    %c0_i32_0 = arith.constant 0 : i32
    %c0_i32_1 = arith.constant 0 : i32
    return %c0_i32, %c0_i32_0 : i32, i32
  }
  func.func @transform_9(%arg0: i32) -> (i32, i32) {
    %c0_i32 = arith.constant 0 : i32
    %c0_i32_0 = arith.constant 0 : i32
    %c0_i32_1 = arith.constant 0 : i32
    return %c0_i32, %c0_i32_0 : i32, i32
  }
  func.func @transform_10(%arg0: i32) -> (i32, i32, i32) {
    %c0_i32 = arith.constant 0 : i32
    %c0_i32_0 = arith.constant 0 : i32
    %c0_i32_1 = arith.constant 0 : i32
    return %arg0, %c0_i32, %c0_i32_0 : i32, i32, i32
  }
}

</mosaic_0001>

<llo_original>
// kernel: simple_gcn_forward.1
$region0: #{simple_gcn_forward.1}
  #allocation0 [shape = 'u32[]', space=smem, size = 0x4, offset = 0x4, fixed_abs, tag = 'smem constant byte address 0x4 - core index']
  #allocation1 [shape = 'u32[144,128]{1,0:T(1,128)}', space=vmem, size = 0x12000, scoped, tag = 'internal scratch']
  %s0 = inlined_call_operand.vmem [shape: s32[4,1,48], index: 0, kind: input, shape index: {}]
  %s1 = inlined_call_operand.vmem [shape: s32[4,48,1], index: 1, kind: input, shape index: {}]
  %s2 = inlined_call_operand.vmem [shape: s32[4,1,16], index: 2, kind: input, shape index: {}]
  %s3 = inlined_call_operand.vmem [shape: f32[4,16,8], index: 3, kind: input, shape index: {}]
  %s4 = inlined_call_operand.vmem [shape: f32[8,32], index: 4, kind: input, shape index: {}]
  %s5 = inlined_call_operand.vmem [shape: f32[1,32], index: 5, kind: input, shape index: {}]
  %s6 = inlined_call_operand.vmem [shape: f32[32,32], index: 6, kind: input, shape index: {}]
  %s7 = inlined_call_operand.vmem [shape: f32[1,32], index: 7, kind: input, shape index: {}]
  %s8 = inlined_call_operand.vmem [shape: f32[32,128], index: 8, kind: input, shape index: {}]
  %s9 = inlined_call_operand.vmem [shape: f32[1,128], index: 9, kind: input, shape index: {}]
  %s10 = inlined_call_operand.vmem [shape: f32[4,8,128], index: 10, kind: output, shape index: {}]
  %s11 = sld [smem:[#allocation0]]
  $region73: #{simple_gcn_forward.1} parent=0
    _
  %s13 = ssub.s32 1, %s11
  %s14 = scalar_select 0, %s13, %s11
  loop: start=0, step=1, limit=6
  $region2: #{simple_gcn_forward.1} parent=0 // loop_pre_header
    _
  $region3: #{simple_gcn_forward.1} parent=0 // loop_header
    %s16 = sphi 0, %s20
    %p17 = scmp.ge.s32.totalorder %s16, 6
    %s26 = sphi 0, %s28
    %s29 = sphi 0, %s26
    %s30 = sphi 0, %s29
    %s46 = sphi 0, %s30
    %s52 = sphi 0, %s54
    %s55 = sphi 0, %s52
    %s56 = sphi 0, %s55
    %s72 = sphi 0, %s56
    %s78 = sphi 0, %s80
    %s81 = sphi 0, %s78
    %s82 = sphi 0, %s81
    %s98 = sphi 0, %s82
    %s104 = sphi 0, %s106
    %s107 = sphi 0, %s104
    %s108 = sphi 0, %s107
    %s124 = sphi 0, %s108
    %s128 = sphi 0, %s128
    %s130 = sphi 0, %s128
    %s131 = sphi 0, %s130
    %s145 = sphi 0, %s131
    %s149 = sphi 0, %s149
    %s151 = sphi 0, %s149
    %s152 = sphi 0, %s151
    %s166 = sphi 0, %s152
    %s170 = sphi 0, %s170
    %s172 = sphi 0, %s170
    %s173 = sphi 0, %s172
    %s187 = sphi 0, %s173
    %s191 = sphi 0, %s191
    %s193 = sphi 0, %s191
    %s194 = sphi 0, %s193
    %s208 = sphi 0, %s194
    %s212 = sphi 0, %s212
    %s214 = sphi 0, %s212
    %s215 = sphi 0, %s214
    %s229 = sphi 0, %s215
    %s233 = sphi 0, %s233
    %s235 = sphi 0, %s233
    %s236 = sphi 0, %s235
    %s250 = sphi 0, %s236
    %s256 = sphi 0, %s258
    %s259 = sphi 0, %s256
    %s260 = sphi 0, %s259
    %s276 = sphi 0, %s260
  $region4: #{simple_gcn_forward.1} parent=0 // loop_header_branch
    %19 = sbr.rel (%p17) target = $region8
  $region5: #{simple_gcn_forward.1} parent=0 // loop_body
    %s21 = ssub.s32 %s16, 1
    %s22 = ssub.s32 %s16, 2
    %s23 = sadd.s32 %s16, 1
    %s24 = ssub.s32 %s16, %s23
    %p25 = scmp.eq.s32.totalorder %s24, 0
    %s27 = sadd.s32 %s26, 1
    %s28 = scalar_select %p25, %s26, %s27
    %p31 = pneg %p25
    %p32 = scmp.eq.s32.totalorder %s16, 3
    %p33 = por %p31, %p32
    %p34 = scmp.ne.s32.totalorder %s26, %s29
    %p35 = scmp.eq.s32.totalorder %s16, 0
    %p36 = por %p34, %p35
    %p37 = scmp.ne.s32.totalorder %s26, %s29
    %p38 = scmp.eq.s32.totalorder %s21, 3
    %p39 = por %p37, %p38
    %p40 = scmp.ne.s32.totalorder %s29, %s30
    %p41 = scmp.eq.s32.totalorder %s21, 0
    %p42 = por %p40, %p41
    %p43 = scmp.ne.s32.totalorder %s29, %s30
    %p44 = scmp.eq.s32.totalorder %s22, 3
    %p45 = por %p43, %p44
    %p47 = scmp.ne.s32.totalorder %s30, %s46
    %p48 = scmp.eq.s32.totalorder %s22, 0
    %p49 = por %p47, %p48
    %s50 = ssub.s32 %s16, %s23
    %p51 = scmp.eq.s32.totalorder %s50, 0
    %s53 = sadd.s32 %s52, 1
    %s54 = scalar_select %p51, %s52, %s53
    %p57 = pneg %p51
    %p58 = scmp.eq.s32.totalorder %s16, 3
    %p59 = por %p57, %p58
    %p60 = scmp.ne.s32.totalorder %s52, %s55
    %p61 = scmp.eq.s32.totalorder %s16, 0
    %p62 = por %p60, %p61
    %p63 = scmp.ne.s32.totalorder %s52, %s55
    %p64 = scmp.eq.s32.totalorder %s21, 3
    %p65 = por %p63, %p64
    %p66 = scmp.ne.s32.totalorder %s55, %s56
    %p67 = scmp.eq.s32.totalorder %s21, 0
    %p68 = por %p66, %p67
    %p69 = scmp.ne.s32.totalorder %s55, %s56
    %p70 = scmp.eq.s32.totalorder %s22, 3
    %p71 = por %p69, %p70
    %p73 = scmp.ne.s32.totalorder %s56, %s72
    %p74 = scmp.eq.s32.totalorder %s22, 0
    %p75 = por %p73, %p74
    %s76 = ssub.s32 %s16, %s23
    %p77 = scmp.eq.s32.totalorder %s76, 0
    %s79 = sadd.s32 %s78, 1
    %s80 = scalar_select %p77, %s78, %s79
    %p83 = pneg %p77
    %p84 = scmp.eq.s32.totalorder %s16, 3
    %p85 = por %p83, %p84
    %p86 = scmp.ne.s32.totalorder %s78, %s81
    %p87 = scmp.eq.s32.totalorder %s16, 0
    %p88 = por %p86, %p87
    %p89 = scmp.ne.s32.totalorder %s78, %s81
    %p90 = scmp.eq.s32.totalorder %s21, 3
    %p91 = por %p89, %p90
    %p92 = scmp.ne.s32.totalorder %s81, %s82
    %p93 = scmp.eq.s32.totalorder %s21, 0
    %p94 = por %p92, %p93
    %p95 = scmp.ne.s32.totalorder %s81, %s82
    %p96 = scmp.eq.s32.totalorder %s22, 3
    %p97 = por %p95, %p96
    %p99 = scmp.ne.s32.totalorder %s82, %s98
    %p100 = scmp.eq.s32.totalorder %s22, 0
    %p101 = por %p99, %p100
    %s102 = ssub.s32 %s16, %s23
    %p103 = scmp.eq.s32.totalorder %s102, 0
    %s105 = sadd.s32 %s104, 1
    %s106 = scalar_select %p103, %s104, %s105
    %p109 = pneg %p103
    %p110 = scmp.eq.s32.totalorder %s16, 3
    %p111 = por %p109, %p110
    %p112 = scmp.ne.s32.totalorder %s104, %s107
    %p113 = scmp.eq.s32.totalorder %s16, 0
    %p114 = por %p112, %p113
    %p115 = scmp.ne.s32.totalorder %s104, %s107
    %p116 = scmp.eq.s32.totalorder %s21, 3
    %p117 = por %p115, %p116
    %p118 = scmp.ne.s32.totalorder %s107, %s108
    %p119 = scmp.eq.s32.totalorder %s21, 0
    %p120 = por %p118, %p119
    %p121 = scmp.ne.s32.totalorder %s107, %s108
    %p122 = scmp.eq.s32.totalorder %s22, 3
    %p123 = por %p121, %p122
    %p125 = scmp.ne.s32.totalorder %s108, %s124
    %p126 = scmp.eq.s32.totalorder %s22, 0
    %p127 = por %p125, %p126
    %s129 = sadd.s32 %s128, 1
    %p132 = scmp.eq.s32.totalorder %s16, 3
    %p133 = scmp.ne.s32.totalorder %s128, %s130
    %p134 = scmp.eq.s32.totalorder %s16, 0
    %p135 = por %p133, %p134
    %p136 = scmp.ne.s32.totalorder %s128, %s130
    %p137 = scmp.eq.s32.totalorder %s21, 3
    %p138 = por %p136, %p137
    %p139 = scmp.ne.s32.totalorder %s130, %s131
    %p140 = scmp.eq.s32.totalorder %s21, 0
    %p141 = por %p139, %p140
    %p142 = scmp.ne.s32.totalorder %s130, %s131
    %p143 = scmp.eq.s32.totalorder %s22, 3
    %p144 = por %p142, %p143
    %p146 = scmp.ne.s32.totalorder %s131, %s145
    %p147 = scmp.eq.s32.totalorder %s22, 0
    %p148 = por %p146, %p147
    %s150 = sadd.s32 %s149, 1
    %p153 = scmp.eq.s32.totalorder %s16, 3
    %p154 = scmp.ne.s32.totalorder %s149, %s151
    %p155 = scmp.eq.s32.totalorder %s16, 0
    %p156 = por %p154, %p155
    %p157 = scmp.ne.s32.totalorder %s149, %s151
    %p158 = scmp.eq.s32.totalorder %s21, 3
    %p159 = por %p157, %p158
    %p160 = scmp.ne.s32.totalorder %s151, %s152
    %p161 = scmp.eq.s32.totalorder %s21, 0
    %p162 = por %p160, %p161
    %p163 = scmp.ne.s32.totalorder %s151, %s152
    %p164 = scmp.eq.s32.totalorder %s22, 3
    %p165 = por %p163, %p164
    %p167 = scmp.ne.s32.totalorder %s152, %s166
    %p168 = scmp.eq.s32.totalorder %s22, 0
    %p169 = por %p167, %p168
    %s171 = sadd.s32 %s170, 1
    %p174 = scmp.eq.s32.totalorder %s16, 3
    %p175 = scmp.ne.s32.totalorder %s170, %s172
    %p176 = scmp.eq.s32.totalorder %s16, 0
    %p177 = por %p175, %p176
    %p178 = scmp.ne.s32.totalorder %s170, %s172
    %p179 = scmp.eq.s32.totalorder %s21, 3
    %p180 = por %p178, %p179
    %p181 = scmp.ne.s32.totalorder %s172, %s173
    %p182 = scmp.eq.s32.totalorder %s21, 0
    %p183 = por %p181, %p182
    %p184 = scmp.ne.s32.totalorder %s172, %s173
    %p185 = scmp.eq.s32.totalorder %s22, 3
    %p186 = por %p184, %p185
    %p188 = scmp.ne.s32.totalorder %s173, %s187
    %p189 = scmp.eq.s32.totalorder %s22, 0
    %p190 = por %p188, %p189
    %s192 = sadd.s32 %s191, 1
    %p195 = scmp.eq.s32.totalorder %s16, 3
    %p196 = scmp.ne.s32.totalorder %s191, %s193
    %p197 = scmp.eq.s32.totalorder %s16, 0
    %p198 = por %p196, %p197
    %p199 = scmp.ne.s32.totalorder %s191, %s193
    %p200 = scmp.eq.s32.totalorder %s21, 3
    %p201 = por %p199, %p200
    %p202 = scmp.ne.s32.totalorder %s193, %s194
    %p203 = scmp.eq.s32.totalorder %s21, 0
    %p204 = por %p202, %p203
    %p205 = scmp.ne.s32.totalorder %s193, %s194
    %p206 = scmp.eq.s32.totalorder %s22, 3
    %p207 = por %p205, %p206
    %p209 = scmp.ne.s32.totalorder %s194, %s208
    %p210 = scmp.eq.s32.totalorder %s22, 0
    %p211 = por %p209, %p210
    %s213 = sadd.s32 %s212, 1
    %p216 = scmp.eq.s32.totalorder %s16, 3
    %p217 = scmp.ne.s32.totalorder %s212, %s214
    %p218 = scmp.eq.s32.totalorder %s16, 0
    %p219 = por %p217, %p218
    %p220 = scmp.ne.s32.totalorder %s212, %s214
    %p221 = scmp.eq.s32.totalorder %s21, 3
    %p222 = por %p220, %p221
    %p223 = scmp.ne.s32.totalorder %s214, %s215
    %p224 = scmp.eq.s32.totalorder %s21, 0
    %p225 = por %p223, %p224
    %p226 = scmp.ne.s32.totalorder %s214, %s215
    %p227 = scmp.eq.s32.totalorder %s22, 3
    %p228 = por %p226, %p227
    %p230 = scmp.ne.s32.totalorder %s215, %s229
    %p231 = scmp.eq.s32.totalorder %s22, 0
    %p232 = por %p230, %p231
    %s234 = sadd.s32 %s233, 1
    %p237 = scmp.eq.s32.totalorder %s16, 3
    %p238 = scmp.ne.s32.totalorder %s233, %s235
    %p239 = scmp.eq.s32.totalorder %s16, 0
    %p240 = por %p238, %p239
    %p241 = scmp.ne.s32.totalorder %s233, %s235
    %p242 = scmp.eq.s32.totalorder %s21, 3
    %p243 = por %p241, %p242
    %p244 = scmp.ne.s32.totalorder %s235, %s236
    %p245 = scmp.eq.s32.totalorder %s21, 0
    %p246 = por %p244, %p245
    %p247 = scmp.ne.s32.totalorder %s235, %s236
    %p248 = scmp.eq.s32.totalorder %s22, 3
    %p249 = por %p247, %p248
    %p251 = scmp.ne.s32.totalorder %s236, %s250
    %p252 = scmp.eq.s32.totalorder %s22, 0
    %p253 = por %p251, %p252
    %s254 = ssub.s32 %s16, %s23
    %p255 = scmp.eq.s32.totalorder %s254, 0
    %s257 = sadd.s32 %s256, 1
    %s258 = scalar_select %p255, %s256, %s257
    %p261 = pneg %p255
    %p262 = scmp.eq.s32.totalorder %s16, 3
    %p263 = por %p261, %p262
    %p264 = scmp.ne.s32.totalorder %s256, %s259
    %p265 = scmp.eq.s32.totalorder %s16, 0
    %p266 = por %p264, %p265
    %p267 = scmp.ne.s32.totalorder %s256, %s259
    %p268 = scmp.eq.s32.totalorder %s21, 3
    %p269 = por %p267, %p268
    %p270 = scmp.ne.s32.totalorder %s259, %s260
    %p271 = scmp.eq.s32.totalorder %s21, 0
    %p272 = por %p270, %p271
    %p273 = scmp.ne.s32.totalorder %s259, %s260
    %p274 = scmp.eq.s32.totalorder %s22, 3
    %p275 = por %p273, %p274
    %p277 = scmp.ne.s32.totalorder %s260, %s276
    %p278 = scmp.eq.s32.totalorder %s22, 0
    %p279 = por %p277, %p278
    %p280 = scmp.le.s32.totalorder 1, %s16
    %p281 = scmp.lt.s32.totalorder %s16, 5
    %p282 = pnand %p280, %p281
    %p283 = pneg %p282
    // Predicated region
    $region9: #{simple_gcn_forward.1} parent=5 // pred_check
      _
    $region10: #{simple_gcn_forward.1} parent=5 // pred_check_branch
      %285 = sbr.rel (%p282) target = $region12
    $region11: #{simple_gcn_forward.1} parent=5 // pred_region
      %s286 = ssub.s32 %s16, 1
      // Predicated region
      $region13: #{simple_gcn_forward.1} parent=11 // pred_check
        %p287 = pneg %p141
      $region14: #{simple_gcn_forward.1} parent=11 // pred_check_branch
        %289 = sbr.rel (%p287) target = $region16
      $region15: #{simple_gcn_forward.1} parent=11 // pred_region
        _
      $region16: #{simple_gcn_forward.1} parent=11 // pred_fallthru
        _
      // Predicated region
      $region17: #{simple_gcn_forward.1} parent=11 // pred_check
        %p290 = pneg %p162
      $region18: #{simple_gcn_forward.1} parent=11 // pred_check_branch
        %292 = sbr.rel (%p290) target = $region20
      $region19: #{simple_gcn_forward.1} parent=11 // pred_region
        _
      $region20: #{simple_gcn_forward.1} parent=11 // pred_fallthru
        _
      // Predicated region
      $region21: #{simple_gcn_forward.1} parent=11 // pred_check
        %p293 = pneg %p183
      $region22: #{simple_gcn_forward.1} parent=11 // pred_check_branch
        %295 = sbr.rel (%p293) target = $region24
      $region23: #{simple_gcn_forward.1} parent=11 // pred_region
        _
      $region24: #{simple_gcn_forward.1} parent=11 // pred_fallthru
        _
      // Predicated region
      $region25: #{simple_gcn_forward.1} parent=11 // pred_check
        %p296 = pneg %p204
      $region26: #{simple_gcn_forward.1} parent=11 // pred_check_branch
        %298 = sbr.rel (%p296) target = $region28
      $region27: #{simple_gcn_forward.1} parent=11 // pred_region
        _
      $region28: #{simple_gcn_forward.1} parent=11 // pred_fallthru
        _
      // Predicated region
      $region29: #{simple_gcn_forward.1} parent=11 // pred_check
        %p299 = pneg %p225
      $region30: #{simple_gcn_forward.1} parent=11 // pred_check_branch
        %301 = sbr.rel (%p299) target = $region32
      $region31: #{simple_gcn_forward.1} parent=11 // pred_region
        _
      $region32: #{simple_gcn_forward.1} parent=11 // pred_fallthru
        _
      // Predicated region
      $region33: #{simple_gcn_forward.1} parent=11 // pred_check
        %p302 = pneg %p246
      $region34: #{simple_gcn_forward.1} parent=11 // pred_check_branch
        %304 = sbr.rel (%p302) target = $region36
      $region35: #{simple_gcn_forward.1} parent=11 // pred_region
        _
      $region36: #{simple_gcn_forward.1} parent=11 // pred_fallthru
        _
    $region12: #{simple_gcn_forward.1} parent=5 // pred_fallthru
      _
    %p305 = scmp.lt.s32.totalorder %s16, 4
    // Predicated region
    $region37: #{simple_gcn_forward.1} parent=5 // pred_check
      %p306 = pneg %p305
    $region38: #{simple_gcn_forward.1} parent=5 // pred_check_branch
      %308 = sbr.rel (%p306) target = $region40
    $region39: #{simple_gcn_forward.1} parent=5 // pred_region
      // Predicated region
      $region41: #{simple_gcn_forward.1} parent=39 // pred_check
        %p309 = pneg %p36
      $region42: #{simple_gcn_forward.1} parent=39 // pred_check_branch
        %311 = sbr.rel (%p309) target = $region44
      $region43: #{simple_gcn_forward.1} parent=39 // pred_region
        %p312 = scmp.lt.s32.totalorder %s16, 3
        %s313 = scalar_select %p312, %s16, 3
        %s314 = scalar_lea.vmem %s0, %s313
      $region44: #{simple_gcn_forward.1} parent=39 // pred_fallthru
        _
      // Predicated region
      $region45: #{simple_gcn_forward.1} parent=39 // pred_check
        %p315 = pneg %p62
      $region46: #{simple_gcn_forward.1} parent=39 // pred_check_branch
        %317 = sbr.rel (%p315) target = $region48
      $region47: #{simple_gcn_forward.1} parent=39 // pred_region
        %p318 = scmp.lt.s32.totalorder %s16, 3
        %s319 = scalar_select %p318, %s16, 3
        %s320 = smul.addr %s319, 6
        %s321 = smul.addr %s320, 8
        %s322 = scalar_lea.vmem %s1, %s321
      $region48: #{simple_gcn_forward.1} parent=39 // pred_fallthru
        _
      // Predicated region
      $region49: #{simple_gcn_forward.1} parent=39 // pred_check
        %p323 = pneg %p88
      $region50: #{simple_gcn_forward.1} parent=39 // pred_check_branch
        %325 = sbr.rel (%p323) target = $region52
      $region51: #{simple_gcn_forward.1} parent=39 // pred_region
        %p326 = scmp.lt.s32.totalorder %s16, 3
        %s327 = scalar_select %p326, %s16, 3
        %s328 = scalar_lea.vmem %s2, %s327
      $region52: #{simple_gcn_forward.1} parent=39 // pred_fallthru
        _
      // Predicated region
      $region53: #{simple_gcn_forward.1} parent=39 // pred_check
        %p329 = pneg %p114
      $region54: #{simple_gcn_forward.1} parent=39 // pred_check_branch
        %331 = sbr.rel (%p329) target = $region56
      $region55: #{simple_gcn_forward.1} parent=39 // pred_region
        %p332 = scmp.lt.s32.totalorder %s16, 3
        %s333 = scalar_select %p332, %s16, 3
        %s334 = smul.addr %s333, 2
        %s335 = smul.addr %s334, 8
        %s336 = scalar_lea.vmem %s3, %s335
      $region56: #{simple_gcn_forward.1} parent=39 // pred_fallthru
        _
    $region40: #{simple_gcn_forward.1} parent=5 // pred_fallthru
      _
    %p337 = scmp.le.s32.totalorder 1, %s16
    %p338 = scmp.lt.s32.totalorder %s16, 5
    %p339 = pnand %p337, %p338
    %p340 = pneg %p339
    // Predicated region
    $region57: #{simple_gcn_forward.1} parent=5 // pred_check
      _
    $region58: #{simple_gcn_forward.1} parent=5 // pred_check_branch
      %342 = sbr.rel (%p339) target = $region60
    $region59: #{simple_gcn_forward.1} parent=5 // pred_region
      %s343 = ssub.s32 %s16, 1
      %p344 = scmp.lt.s32.totalorder %s21, 3
      %s345 = scalar_select %p344, %s21, 3
      %s346 = scalar_lea.vmem %s0, %s345
      %p347 = pneg %p42
      %p348 = pneg %p39
      %p349 = scmp.lt.s32.totalorder %s21, 3
      %s350 = scalar_select %p349, %s21, 3
      %s351 = smul.addr %s350, 6
      %s352 = smul.addr %s351, 8
      %s353 = scalar_lea.vmem %s1, %s352
      %p354 = pneg %p68
      %p355 = pneg %p65
      %p356 = scmp.lt.s32.totalorder %s21, 3
      %s357 = scalar_select %p356, %s21, 3
      %s358 = scalar_lea.vmem %s2, %s357
      %p359 = pneg %p94
      %p360 = pneg %p91
      %p361 = scmp.lt.s32.totalorder %s21, 3
      %s362 = scalar_select %p361, %s21, 3
      %s363 = smul.addr %s362, 2
      %s364 = smul.addr %s363, 8
      %s365 = scalar_lea.vmem %s3, %s364
      %p366 = pneg %p120
      %p367 = pneg %p117
      %p368 = pneg %p141
      %p369 = pneg %p138
      %p370 = pneg %p162
      %p371 = pneg %p159
      %p372 = pneg %p183
      %p373 = pneg %p180
      %p374 = pneg %p204
      %p375 = pneg %p201
      %p376 = pneg %p225
      %p377 = pneg %p222
      %p378 = pneg %p246
      %p379 = pneg %p243
      %p380 = pneg %p272
      %p381 = pneg %p269
      %p382 = scmp.lt.s32.totalorder %s21, 3
      %s383 = scalar_select %p382, %s21, 3
      %s384 = smul.addr %s383, 8
      %s385 = scalar_lea.vmem %s10, %s384
      %p386 = scmp.lt.s32.totalorder %s21, 3
      %s387 = scalar_select %p386, %s21, 3
      %s388 = scalar_lea.vmem %s0, %s387
      %p389 = scmp.lt.s32.totalorder %s21, 3
      %s390 = scalar_select %p389, %s21, 3
      %s391 = smul.addr %s390, 6
      %s392 = smul.addr %s391, 8
      %s393 = scalar_lea.vmem %s1, %s392
      %p394 = scmp.lt.s32.totalorder %s21, 3
      %s395 = scalar_select %p394, %s21, 3
      %s396 = scalar_lea.vmem %s2, %s395
      %p397 = scmp.lt.s32.totalorder %s21, 3
      %s398 = scalar_select %p397, %s21, 3
      %s399 = smul.addr %s398, 2
      %s400 = smul.addr %s399, 8
      %s401 = scalar_lea.vmem %s3, %s400
      %p402 = scmp.lt.s32.totalorder %s21, 3
      %s403 = scalar_select %p402, %s21, 3
      %s404 = smul.addr %s403, 8
      %s405 = scalar_lea.vmem %s10, %s404
      %v406 = vld [vmem:[%s388] sm:$0x1]
      %v407 = vld [vmem:[%s393] sm:$0xff]
      %v408 = vld [vmem:[%s393 + $0x8] sm:$0xff]
      %v409 = vld [vmem:[%s393 + $0x10] sm:$0xff]
      %v410 = vld [vmem:[%s393 + $0x18] sm:$0xff]
      %v411 = vld [vmem:[%s393 + $0x20] sm:$0xff]
      %v412 = vld [vmem:[%s393 + $0x28] sm:$0xff]
      %v413 = vlaneseq
      %v414 = vshrl.u32 %v413, 7
      %v415 = vadd.s32 %v414, 8
      %v416 = vlaneseq
      %v417 = vshrl.u32 %v416, 7
      %v418 = vsub.s32 0, %v417
      %v419 = vrot.slane %v406, %v418
      %vm420 = vcmp.eq.s32.totalorder %v414, %v419
      %vm421 = vcmp.eq.s32.totalorder %v415, %v419
      %v422 = vsel %vm420, 1, 0
      %v423 = vsel %vm421, 1, 0
      %v424 = vcvt.s32.f32 %v422
      %v425 = vcvt.s32.f32 %v423
      %v426 = vlaneseq
      %v427 = vand.u32 %v426, 127
      %428 = vset.pattern.permute.xlu0 0
      %429 = vperm.xlu0 %428, %v407
      %v430 = vpop.permute.xlu0 %429
      %431 = vset.pattern.permute.xlu0 0
      %432 = vperm.xlu0 %431, %v408
      %v433 = vpop.permute.xlu0 %432
      %434 = vset.pattern.permute.xlu0 0
      %435 = vperm.xlu0 %434, %v409
      %v436 = vpop.permute.xlu0 %435
      %437 = vset.pattern.permute.xlu0 0
      %438 = vperm.xlu0 %437, %v410
      %v439 = vpop.permute.xlu0 %438
      %440 = vset.pattern.permute.xlu0 0
      %441 = vperm.xlu0 %440, %v411
      %v442 = vpop.permute.xlu0 %441
      %443 = vset.pattern.permute.xlu0 0
      %444 = vperm.xlu0 %443, %v412
      %v445 = vpop.permute.xlu0 %444
      %vm446 = vcmp.eq.s32.totalorder %v427, %v430
      %vm447 = vcmp.eq.s32.totalorder %v427, %v433
      %vm448 = vcmp.eq.s32.totalorder %v427, %v436
      %vm449 = vcmp.eq.s32.totalorder %v427, %v439
      %vm450 = vcmp.eq.s32.totalorder %v427, %v442
      %vm451 = vcmp.eq.s32.totalorder %v427, %v445
      %v452 = vsel %vm446, 1, 0
      %v453 = vsel %vm447, 1, 0
      %v454 = vsel %vm448, 1, 0
      %v455 = vsel %vm449, 1, 0
      %v456 = vsel %vm450, 1, 0
      %v457 = vsel %vm451, 1, 0
      %v458 = vcvt.s32.f32 %v452
      %v459 = vcvt.s32.f32 %v453
      %v460 = vcvt.s32.f32 %v454
      %v461 = vcvt.s32.f32 %v455
      %v462 = vcvt.s32.f32 %v456
      %v463 = vcvt.s32.f32 %v457
      %vm464 = vcmask 392192
      %v466 = vsel %vm464, %v424, 0
      %v469 = vsel %vm464, %v425, 0
      %471 = vmatprep.subr.mxu0 0.0
      %472 = vmatpush1.msra.mxu0 0.0
      %473 = vmatprep.subr.mxu0 0.0
      %474 = vmatpush1.msra.mxu0 0.0
      %475 = vmatprep.subr.mxu0 0.0
      %476 = vmatpush1.msra.mxu0 0.0
      %477 = vmatprep.subr.mxu0 0.0
      %478 = vmatpush1.msra.mxu0 0.0
      %479 = vmatprep.subr.mxu0 0.0
      %480 = vmatpush1.msra.mxu0 0.0
      %481 = vmatprep.subr.mxu0 0.0
      %482 = vmatpush1.msra.mxu0 0.0
      %483 = vmatprep.subr.mxu0 0.0
      %484 = vmatpush1.msra.mxu0 0.0
      %485 = vmatprep.subr.mxu0 0.0
      %486 = vmatpush1.msra.mxu0 0.0
      %487 = vmatprep.subr.mxu0 0.0
      %488 = vmatpush1.msra.mxu0 0.0
      %489 = vmatprep.subr.mxu0 0.0
      %490 = vmatpush1.msra.mxu0 0.0
      %491 = vmatprep.subr.mxu0 0.0
      %492 = vmatpush1.msra.mxu0 %v463
      %493 = vmatprep.subr.mxu0 0.0
      %494 = vmatpush1.msra.mxu0 %v462
      %495 = vmatprep.subr.mxu0 0.0
      %496 = vmatpush1.msra.mxu0 %v461
      %497 = vmatprep.subr.mxu0 0.0
      %498 = vmatpush1.msra.mxu0 %v460
      %499 = vmatprep.subr.mxu0 0.0
      %500 = vmatpush1.msra.mxu0 %v459
      %501 = vmatprep.subr.mxu0 0.0
      %502 = vmatpush1.msra.mxu0 %v458
      %503 = vmatprep.subr.mxu0 0.0
      %504 = vmatpush2.msra.mxu0 0.0
      %505 = vmatprep.subr.mxu0 0.0
      %506 = vmatpush2.msra.mxu0 0.0
      %507 = vmatprep.subr.mxu0 0.0
      %508 = vmatpush2.msra.mxu0 0.0
      %509 = vmatprep.subr.mxu0 0.0
      %510 = vmatpush2.msra.mxu0 0.0
      %511 = vmatprep.subr.mxu0 0.0
      %512 = vmatpush2.msra.mxu0 0.0
      %513 = vmatprep.subr.mxu0 0.0
      %514 = vmatpush2.msra.mxu0 0.0
      %515 = vmatprep.subr.mxu0 0.0
      %516 = vmatpush2.msra.mxu0 0.0
      %517 = vmatprep.subr.mxu0 0.0
      %518 = vmatpush2.msra.mxu0 0.0
      %519 = vmatprep.subr.mxu0 0.0
      %520 = vmatpush2.msra.mxu0 0.0
      %521 = vmatprep.subr.mxu0 0.0
      %522 = vmatpush2.msra.mxu0 0.0
      %523 = vmatprep.subr.mxu0 0.0
      %524 = vmatpush2.msra.mxu0 0.0
      %525 = vmatprep.subr.mxu0 0.0
      %526 = vmatpush2.msra.mxu0 0.0
      %527 = vmatprep.subr.mxu0 0.0
      %528 = vmatpush2.msra.mxu0 0.0
      %529 = vmatprep.subr.mxu0 0.0
      %530 = vmatpush2.msra.mxu0 0.0
      %531 = vmatprep.subr.mxu0 0.0
      %532 = vmatpush2.msra.mxu0 0.0
      %533 = vmatprep.subr.mxu0 0.0
      %534 = vmatpush2.msra.mxu0 0.0
      %535 = vmatprep.mubr.f32.mxu0 0.0
      %536 = vmatmul.mubr.f32.gmra.mxu0 %v466
      %v537 = vpop.f32.mrf.mxu0
      %v538 = vadd.f32 0.0, %v537
      %v539 = vpop.f32.mrf.mxu0
      %540 = vmatprep.mubr.f32.mxu0 0.0
      %541 = vmatmul.mubr.f32.gmra.mxu0 %v469
      %v542 = vpop.f32.mrf.mxu0
      %v543 = vadd.f32 0.0, %v542
      %v544 = vpop.f32.mrf.mxu0
      %545 = vdwg.mxu0
      %vm546 = vcmask 130048
      %v547 = vsel %vm546, %v538, 0.0
      %548 = vadd.xlane.f32.xlu0 %v547
      %v549 = vpop.xlane.xlu0 %548
      %v550 = vsel %vm546, %v543, 0.0
      %551 = vadd.xlane.f32.xlu0 %v550
      %v552 = vpop.xlane.xlu0 %551
      %vm553 = vcmp.gt.f32.partialorder %v549, 0.0
      %vm554 = vcmp.gt.f32.partialorder %v552, 0.0
      %v555 = vrsqrt.pop %v549
      %v556 = vrsqrt.pop %v552
      %v557 = vsel %vm553, %v555, 0.0
      %v558 = vsel %vm554, %v556, 0.0
      %v559 = vld [vmem:[%s396] sm:$0x1]
      %v560 = vlaneseq
      %v561 = vshrl.u32 %v560, 7
      %v562 = vsub.s32 0, %v561
      %v563 = vrot.slane %v559, %v562
      %vm564 = vcmp.eq.s32.totalorder %v414, %v563
      %v565 = vsel %vm564, 1, 0
      %v566 = vcvt.s32.f32 %v565
      %v567 = vsel %vm546, %v566, 0.0
      %568 = vadd.xlane.f32.xlu0 %v567
      %v569 = vpop.xlane.xlu0 %568
      %v570 = vmax.f32 %v569, 1.0
      %v571 = vrcp.pop %v570
      %v572 = vmul.f32 %v566, %v571
      %v573 = vld [vmem:[%s401] sm:$0xff]
      %v574 = vld [vmem:[%s401 + $0x8] sm:$0xff]
      %v575 = vmul.f32 %v557, %v573
      %v576 = vmul.f32 %v558, %v574
      %v578 = vsel %vm546, %v538, 0
      %v581 = vsel %vm546, %v543, 0
      %583 = vmatprep.subr.mxu0 0.0
      %584 = vmatpush1.msra.mxu0 0.0
      %585 = vmatprep.subr.mxu0 0.0
      %586 = vmatpush1.msra.mxu0 0.0
      %587 = vmatprep.subr.mxu0 0.0
      %588 = vmatpush1.msra.mxu0 0.0
      %589 = vmatprep.subr.mxu0 0.0
      %590 = vmatpush1.msra.mxu0 0.0
      %591 = vmatprep.subr.mxu0 0.0
      %592 = vmatpush1.msra.mxu0 0.0
      %593 = vmatprep.subr.mxu0 0.0
      %594 = vmatpush1.msra.mxu0 0.0
      %595 = vmatprep.subr.mxu0 0.0
      %596 = vmatpush1.msra.mxu0 0.0
      %597 = vmatprep.subr.mxu0 0.0
      %598 = vmatpush1.msra.mxu0 0.0
      %599 = vmatprep.subr.mxu0 0.0
      %600 = vmatpush1.msra.mxu0 0.0
      %601 = vmatprep.subr.mxu0 0.0
      %602 = vmatpush1.msra.mxu0 0.0
      %603 = vmatprep.subr.mxu0 0.0
      %604 = vmatpush1.msra.mxu0 0.0
      %605 = vmatprep.subr.mxu0 0.0
      %606 = vmatpush1.msra.mxu0 0.0
      %607 = vmatprep.subr.mxu0 0.0
      %608 = vmatpush1.msra.mxu0 0.0
      %609 = vmatprep.subr.mxu0 0.0
      %610 = vmatpush1.msra.mxu0 0.0
      %611 = vmatprep.subr.mxu0 0.0
      %612 = vmatpush1.msra.mxu0 %v576
      %613 = vmatprep.subr.mxu0 0.0
      %614 = vmatpush1.msra.mxu0 %v575
      %615 = vmatprep.subr.mxu0 0.0
      %616 = vmatpush2.msra.mxu0 0.0
      %617 = vmatprep.subr.mxu0 0.0
      %618 = vmatpush2.msra.mxu0 0.0
      %619 = vmatprep.subr.mxu0 0.0
      %620 = vmatpush2.msra.mxu0 0.0
      %621 = vmatprep.subr.mxu0 0.0
      %622 = vmatpush2.msra.mxu0 0.0
      %623 = vmatprep.subr.mxu0 0.0
      %624 = vmatpush2.msra.mxu0 0.0
      %625 = vmatprep.subr.mxu0 0.0
      %626 = vmatpush2.msra.mxu0 0.0
      %627 = vmatprep.subr.mxu0 0.0
      %628 = vmatpush2.msra.mxu0 0.0
      %629 = vmatprep.subr.mxu0 0.0
      %630 = vmatpush2.msra.mxu0 0.0
      %631 = vmatprep.subr.mxu0 0.0
      %632 = vmatpush2.msra.mxu0 0.0
      %633 = vmatprep.subr.mxu0 0.0
      %634 = vmatpush2.msra.mxu0 0.0
      %635 = vmatprep.subr.mxu0 0.0
      %636 = vmatpush2.msra.mxu0 0.0
      %637 = vmatprep.subr.mxu0 0.0
      %638 = vmatpush2.msra.mxu0 0.0
      %639 = vmatprep.subr.mxu0 0.0
      %640 = vmatpush2.msra.mxu0 0.0
      %641 = vmatprep.subr.mxu0 0.0
      %642 = vmatpush2.msra.mxu0 0.0
      %643 = vmatprep.subr.mxu0 0.0
      %644 = vmatpush2.msra.mxu0 0.0
      %645 = vmatprep.subr.mxu0 0.0
      %646 = vmatpush2.msra.mxu0 0.0
      %647 = vmatprep.mubr.f32.mxu0 0.0
      %648 = vmatmul.mubr.f32.gmra.mxu0 %v578
      %v649 = vpop.f32.mrf.mxu0
      %v650 = vadd.f32 0.0, %v649
      %v651 = vpop.f32.mrf.mxu0
      %652 = vmatprep.mubr.f32.mxu0 0.0
      %653 = vmatmul.mubr.f32.gmra.mxu0 %v581
      %v654 = vpop.f32.mrf.mxu0
      %v655 = vadd.f32 0.0, %v654
      %v656 = vpop.f32.mrf.mxu0
      %657 = vdwg.mxu0
      %v658 = vmul.f32 %v557, %v650
      %v659 = vmul.f32 %v558, %v655
      %v660 = vld [vmem:[%s4] sm:$0xff]
      %v661 = vld [vmem:[%s5] sm:$0x1]
      %v663 = vlaneseq
      %v664 = vshrl.u32 %v663, 7
      %v665 = vsub.s32 0, %v664
      %v666 = vrot.slane %v661, %v665
      %vm668 = vcmask 64512
      %v670 = vsel %vm668, %v658, 0
      %v673 = vsel %vm668, %v659, 0
      %675 = vmatprep.subr.mxu0 0.0
      %676 = vmatpush1.msra.mxu0 0.0
      %677 = vmatprep.subr.mxu0 0.0
      %678 = vmatpush1.msra.mxu0 0.0
      %679 = vmatprep.subr.mxu0 0.0
      %680 = vmatpush1.msra.mxu0 0.0
      %681 = vmatprep.subr.mxu0 0.0
      %682 = vmatpush1.msra.mxu0 0.0
      %683 = vmatprep.subr.mxu0 0.0
      %684 = vmatpush1.msra.mxu0 0.0
      %685 = vmatprep.subr.mxu0 0.0
      %686 = vmatpush1.msra.mxu0 0.0
      %687 = vmatprep.subr.mxu0 0.0
      %688 = vmatpush1.msra.mxu0 0.0
      %689 = vmatprep.subr.mxu0 0.0
      %690 = vmatpush1.msra.mxu0 0.0
      %691 = vmatprep.subr.mxu0 0.0
      %692 = vmatpush1.msra.mxu0 0.0
      %693 = vmatprep.subr.mxu0 0.0
      %694 = vmatpush1.msra.mxu0 0.0
      %695 = vmatprep.subr.mxu0 0.0
      %696 = vmatpush1.msra.mxu0 0.0
      %697 = vmatprep.subr.mxu0 0.0
      %698 = vmatpush1.msra.mxu0 0.0
      %699 = vmatprep.subr.mxu0 0.0
      %700 = vmatpush1.msra.mxu0 0.0
      %701 = vmatprep.subr.mxu0 0.0
      %702 = vmatpush1.msra.mxu0 0.0
      %703 = vmatprep.subr.mxu0 0.0
      %704 = vmatpush1.msra.mxu0 0.0
      %705 = vmatprep.subr.mxu0 0.0
      %706 = vmatpush1.msra.mxu0 %v660
      %707 = vmatprep.subr.mxu0 0.0
      %708 = vmatpush2.msra.mxu0 0.0
      %709 = vmatprep.subr.mxu0 0.0
      %710 = vmatpush2.msra.mxu0 0.0
      %711 = vmatprep.subr.mxu0 0.0
      %712 = vmatpush2.msra.mxu0 0.0
      %713 = vmatprep.subr.mxu0 0.0
      %714 = vmatpush2.msra.mxu0 0.0
      %715 = vmatprep.subr.mxu0 0.0
      %716 = vmatpush2.msra.mxu0 0.0
      %717 = vmatprep.subr.mxu0 0.0
      %718 = vmatpush2.msra.mxu0 0.0
      %719 = vmatprep.subr.mxu0 0.0
      %720 = vmatpush2.msra.mxu0 0.0
      %721 = vmatprep.subr.mxu0 0.0
      %722 = vmatpush2.msra.mxu0 0.0
      %723 = vmatprep.subr.mxu0 0.0
      %724 = vmatpush2.msra.mxu0 0.0
      %725 = vmatprep.subr.mxu0 0.0
      %726 = vmatpush2.msra.mxu0 0.0
      %727 = vmatprep.subr.mxu0 0.0
      %728 = vmatpush2.msra.mxu0 0.0
      %729 = vmatprep.subr.mxu0 0.0
      %730 = vmatpush2.msra.mxu0 0.0
      %731 = vmatprep.subr.mxu0 0.0
      %732 = vmatpush2.msra.mxu0 0.0
      %733 = vmatprep.subr.mxu0 0.0
      %734 = vmatpush2.msra.mxu0 0.0
      %735 = vmatprep.subr.mxu0 0.0
      %736 = vmatpush2.msra.mxu0 0.0
      %737 = vmatprep.subr.mxu0 0.0
      %738 = vmatpush2.msra.mxu0 0.0
      %739 = vmatprep.mubr.f32.mxu0 0.0
      %740 = vmatmul.mubr.f32.gmra.mxu0 %v670
      %v741 = vpop.f32.mrf.mxu0
      %v742 = vadd.f32 %v666, %v741
      %v743 = vpop.f32.mrf.mxu0
      %744 = vmatprep.mubr.f32.mxu0 0.0
      %745 = vmatmul.mubr.f32.gmra.mxu0 %v673
      %v746 = vpop.f32.mrf.mxu0
      %v747 = vadd.f32 %v666, %v746
      %v748 = vpop.f32.mrf.mxu0
      %749 = vdwg.mxu0
      %v750 = vmax.f32 %v742, 0.0
      %v751 = vmax.f32 %v747, 0.0
      %v752 = vld [vmem:[%s6] sm:$0xff]
      %v753 = vld [vmem:[%s6 + $0x8] sm:$0xff]
      %v754 = vld [vmem:[%s6 + $0x10] sm:$0xff]
      %v755 = vld [vmem:[%s6 + $0x18] sm:$0xff]
      %vm756 = vcmask 261120
      %v758 = vsel %vm756, %v750, 0
      %v761 = vsel %vm756, %v751, 0
      %763 = vmatprep.subr.mxu0 0.0
      %764 = vmatpush1.msra.mxu0 0.0
      %765 = vmatprep.subr.mxu0 0.0
      %766 = vmatpush1.msra.mxu0 0.0
      %767 = vmatprep.subr.mxu0 0.0
      %768 = vmatpush1.msra.mxu0 0.0
      %769 = vmatprep.subr.mxu0 0.0
      %770 = vmatpush1.msra.mxu0 0.0
      %771 = vmatprep.subr.mxu0 0.0
      %772 = vmatpush1.msra.mxu0 0.0
      %773 = vmatprep.subr.mxu0 0.0
      %774 = vmatpush1.msra.mxu0 0.0
      %775 = vmatprep.subr.mxu0 0.0
      %776 = vmatpush1.msra.mxu0 0.0
      %777 = vmatprep.subr.mxu0 0.0
      %778 = vmatpush1.msra.mxu0 0.0
      %779 = vmatprep.subr.mxu0 0.0
      %780 = vmatpush1.msra.mxu0 0.0
      %781 = vmatprep.subr.mxu0 0.0
      %782 = vmatpush1.msra.mxu0 0.0
      %783 = vmatprep.subr.mxu0 0.0
      %784 = vmatpush1.msra.mxu0 0.0
      %785 = vmatprep.subr.mxu0 0.0
      %786 = vmatpush1.msra.mxu0 0.0
      %787 = vmatprep.subr.mxu0 0.0
      %788 = vmatpush1.msra.mxu0 %v755
      %789 = vmatprep.subr.mxu0 0.0
      %790 = vmatpush1.msra.mxu0 %v754
      %791 = vmatprep.subr.mxu0 0.0
      %792 = vmatpush1.msra.mxu0 %v753
      %793 = vmatprep.subr.mxu0 0.0
      %794 = vmatpush1.msra.mxu0 %v752
      %795 = vmatprep.subr.mxu0 0.0
      %796 = vmatpush2.msra.mxu0 0.0
      %797 = vmatprep.subr.mxu0 0.0
      %798 = vmatpush2.msra.mxu0 0.0
      %799 = vmatprep.subr.mxu0 0.0
      %800 = vmatpush2.msra.mxu0 0.0
      %801 = vmatprep.subr.mxu0 0.0
      %802 = vmatpush2.msra.mxu0 0.0
      %803 = vmatprep.subr.mxu0 0.0
      %804 = vmatpush2.msra.mxu0 0.0
      %805 = vmatprep.subr.mxu0 0.0
      %806 = vmatpush2.msra.mxu0 0.0
      %807 = vmatprep.subr.mxu0 0.0
      %808 = vmatpush2.msra.mxu0 0.0
      %809 = vmatprep.subr.mxu0 0.0
      %810 = vmatpush2.msra.mxu0 0.0
      %811 = vmatprep.subr.mxu0 0.0
      %812 = vmatpush2.msra.mxu0 0.0
      %813 = vmatprep.subr.mxu0 0.0
      %814 = vmatpush2.msra.mxu0 0.0
      %815 = vmatprep.subr.mxu0 0.0
      %816 = vmatpush2.msra.mxu0 0.0
      %817 = vmatprep.subr.mxu0 0.0
      %818 = vmatpush2.msra.mxu0 0.0
      %819 = vmatprep.subr.mxu0 0.0
      %820 = vmatpush2.msra.mxu0 0.0
      %821 = vmatprep.subr.mxu0 0.0
      %822 = vmatpush2.msra.mxu0 0.0
      %823 = vmatprep.subr.mxu0 0.0
      %824 = vmatpush2.msra.mxu0 0.0
      %825 = vmatprep.subr.mxu0 0.0
      %826 = vmatpush2.msra.mxu0 0.0
      %827 = vmatprep.mubr.f32.mxu0 0.0
      %828 = vmatmul.mubr.f32.gmra.mxu0 %v758
      %v829 = vpop.f32.mrf.mxu0
      %v830 = vadd.f32 0.0, %v829
      %v831 = vpop.f32.mrf.mxu0
      %832 = vmatprep.mubr.f32.mxu0 0.0
      %833 = vmatmul.mubr.f32.gmra.mxu0 %v761
      %v834 = vpop.f32.mrf.mxu0
      %v835 = vadd.f32 0.0, %v834
      %v836 = vpop.f32.mrf.mxu0
      %837 = vdwg.mxu0
      %v838 = vmul.f32 %v557, %v830
      %v839 = vmul.f32 %v558, %v835
      %840 = vmatprep.subr.mxu0 0.0
      %841 = vmatpush1.msra.mxu0 0.0
      %842 = vmatprep.subr.mxu0 0.0
      %843 = vmatpush1.msra.mxu0 0.0
      %844 = vmatprep.subr.mxu0 0.0
      %845 = vmatpush1.msra.mxu0 0.0
      %846 = vmatprep.subr.mxu0 0.0
      %847 = vmatpush1.msra.mxu0 0.0
      %848 = vmatprep.subr.mxu0 0.0
      %849 = vmatpush1.msra.mxu0 0.0
      %850 = vmatprep.subr.mxu0 0.0
      %851 = vmatpush1.msra.mxu0 0.0
      %852 = vmatprep.subr.mxu0 0.0
      %853 = vmatpush1.msra.mxu0 0.0
      %854 = vmatprep.subr.mxu0 0.0
      %855 = vmatpush1.msra.mxu0 0.0
      %856 = vmatprep.subr.mxu0 0.0
      %857 = vmatpush1.msra.mxu0 0.0
      %858 = vmatprep.subr.mxu0 0.0
      %859 = vmatpush1.msra.mxu0 0.0
      %860 = vmatprep.subr.mxu0 0.0
      %861 = vmatpush1.msra.mxu0 0.0
      %862 = vmatprep.subr.mxu0 0.0
      %863 = vmatpush1.msra.mxu0 0.0
      %864 = vmatprep.subr.mxu0 0.0
      %865 = vmatpush1.msra.mxu0 0.0
      %866 = vmatprep.subr.mxu0 0.0
      %867 = vmatpush1.msra.mxu0 0.0
      %868 = vmatprep.subr.mxu0 0.0
      %869 = vmatpush1.msra.mxu0 %v839
      %870 = vmatprep.subr.mxu0 0.0
      %871 = vmatpush1.msra.mxu0 %v838
      %872 = vmatprep.subr.mxu0 0.0
      %873 = vmatpush2.msra.mxu0 0.0
      %874 = vmatprep.subr.mxu0 0.0
      %875 = vmatpush2.msra.mxu0 0.0
      %876 = vmatprep.subr.mxu0 0.0
      %877 = vmatpush2.msra.mxu0 0.0
      %878 = vmatprep.subr.mxu0 0.0
      %879 = vmatpush2.msra.mxu0 0.0
      %880 = vmatprep.subr.mxu0 0.0
      %881 = vmatpush2.msra.mxu0 0.0
      %882 = vmatprep.subr.mxu0 0.0
      %883 = vmatpush2.msra.mxu0 0.0
      %884 = vmatprep.subr.mxu0 0.0
      %885 = vmatpush2.msra.mxu0 0.0
      %886 = vmatprep.subr.mxu0 0.0
      %887 = vmatpush2.msra.mxu0 0.0
      %888 = vmatprep.subr.mxu0 0.0
      %889 = vmatpush2.msra.mxu0 0.0
      %890 = vmatprep.subr.mxu0 0.0
      %891 = vmatpush2.msra.mxu0 0.0
      %892 = vmatprep.subr.mxu0 0.0
      %893 = vmatpush2.msra.mxu0 0.0
      %894 = vmatprep.subr.mxu0 0.0
      %895 = vmatpush2.msra.mxu0 0.0
      %896 = vmatprep.subr.mxu0 0.0
      %897 = vmatpush2.msra.mxu0 0.0
      %898 = vmatprep.subr.mxu0 0.0
      %899 = vmatpush2.msra.mxu0 0.0
      %900 = vmatprep.subr.mxu0 0.0
      %901 = vmatpush2.msra.mxu0 0.0
      %902 = vmatprep.subr.mxu0 0.0
      %903 = vmatpush2.msra.mxu0 0.0
      %904 = vmatprep.mubr.f32.mxu0 0.0
      %905 = vmatmul.mubr.f32.gmra.mxu0 %v578
      %v906 = vpop.f32.mrf.mxu0
      %v907 = vadd.f32 0.0, %v906
      %v908 = vpop.f32.mrf.mxu0
      %909 = vmatprep.mubr.f32.mxu0 0.0
      %910 = vmatmul.mubr.f32.gmra.mxu0 %v581
      %v911 = vpop.f32.mrf.mxu0
      %v912 = vadd.f32 0.0, %v911
      %v913 = vpop.f32.mrf.mxu0
      %914 = vdwg.mxu0
      %v915 = vmul.f32 %v557, %v907
      %v916 = vmul.f32 %v558, %v912
      %v917 = vld [vmem:[%s7] sm:$0x1]
      %v919 = vlaneseq
      %v920 = vshrl.u32 %v919, 7
      %v921 = vsub.s32 0, %v920
      %v922 = vrot.slane %v917, %v921
      %v924 = vadd.f32 %v915, %v922
      %v925 = vadd.f32 %v916, %v922
      %v926 = vmax.f32 %v924, 0.0
      %v927 = vmax.f32 %v925, 0.0
      %v929 = vsel %vm546, %v572, 0
      %931 = vmatprep.subr.mxu0 0.0
      %932 = vmatpush1.msra.mxu0 0.0
      %933 = vmatprep.subr.mxu0 0.0
      %934 = vmatpush1.msra.mxu0 0.0
      %935 = vmatprep.subr.mxu0 0.0
      %936 = vmatpush1.msra.mxu0 0.0
      %937 = vmatprep.subr.mxu0 0.0
      %938 = vmatpush1.msra.mxu0 0.0
      %939 = vmatprep.subr.mxu0 0.0
      %940 = vmatpush1.msra.mxu0 0.0
      %941 = vmatprep.subr.mxu0 0.0
      %942 = vmatpush1.msra.mxu0 0.0
      %943 = vmatprep.subr.mxu0 0.0
      %944 = vmatpush1.msra.mxu0 0.0
      %945 = vmatprep.subr.mxu0 0.0
      %946 = vmatpush1.msra.mxu0 0.0
      %947 = vmatprep.subr.mxu0 0.0
      %948 = vmatpush1.msra.mxu0 0.0
      %949 = vmatprep.subr.mxu0 0.0
      %950 = vmatpush1.msra.mxu0 0.0
      %951 = vmatprep.subr.mxu0 0.0
      %952 = vmatpush1.msra.mxu0 0.0
      %953 = vmatprep.subr.mxu0 0.0
      %954 = vmatpush1.msra.mxu0 0.0
      %955 = vmatprep.subr.mxu0 0.0
      %956 = vmatpush1.msra.mxu0 0.0
      %957 = vmatprep.subr.mxu0 0.0
      %958 = vmatpush1.msra.mxu0 0.0
      %959 = vmatprep.subr.mxu0 0.0
      %960 = vmatpush1.msra.mxu0 %v927
      %961 = vmatprep.subr.mxu0 0.0
      %962 = vmatpush1.msra.mxu0 %v926
      %963 = vmatprep.subr.mxu0 0.0
      %964 = vmatpush2.msra.mxu0 0.0
      %965 = vmatprep.subr.mxu0 0.0
      %966 = vmatpush2.msra.mxu0 0.0
      %967 = vmatprep.subr.mxu0 0.0
      %968 = vmatpush2.msra.mxu0 0.0
      %969 = vmatprep.subr.mxu0 0.0
      %970 = vmatpush2.msra.mxu0 0.0
      %971 = vmatprep.subr.mxu0 0.0
      %972 = vmatpush2.msra.mxu0 0.0
      %973 = vmatprep.subr.mxu0 0.0
      %974 = vmatpush2.msra.mxu0 0.0
      %975 = vmatprep.subr.mxu0 0.0
      %976 = vmatpush2.msra.mxu0 0.0
      %977 = vmatprep.subr.mxu0 0.0
      %978 = vmatpush2.msra.mxu0 0.0
      %979 = vmatprep.subr.mxu0 0.0
      %980 = vmatpush2.msra.mxu0 0.0
      %981 = vmatprep.subr.mxu0 0.0
      %982 = vmatpush2.msra.mxu0 0.0
      %983 = vmatprep.subr.mxu0 0.0
      %984 = vmatpush2.msra.mxu0 0.0
      %985 = vmatprep.subr.mxu0 0.0
      %986 = vmatpush2.msra.mxu0 0.0
      %987 = vmatprep.subr.mxu0 0.0
      %988 = vmatpush2.msra.mxu0 0.0
      %989 = vmatprep.subr.mxu0 0.0
      %990 = vmatpush2.msra.mxu0 0.0
      %991 = vmatprep.subr.mxu0 0.0
      %992 = vmatpush2.msra.mxu0 0.0
      %993 = vmatprep.subr.mxu0 0.0
      %994 = vmatpush2.msra.mxu0 0.0
      %995 = vmatprep.mubr.f32.mxu0 0.0
      %996 = vmatmul.mubr.f32.gmra.mxu0 %v929
      %v997 = vpop.f32.mrf.mxu0
      %v998 = vadd.f32 0.0, %v997
      %v999 = vpop.f32.mrf.mxu0
      %1000 = vdwg.mxu0
      %v1001 = vld [vmem:[%s8] sm:$0xff]
      %v1002 = vld [vmem:[%s8 + $0x8] sm:$0xff]
      %v1003 = vld [vmem:[%s8 + $0x10] sm:$0xff]
      %v1004 = vld [vmem:[%s8 + $0x18] sm:$0xff]
      %v1005 = vld [vmem:[%s9] sm:$0x1]
      %v1007 = vlaneseq
      %v1008 = vshrl.u32 %v1007, 7
      %v1009 = vsub.s32 0, %v1008
      %v1010 = vrot.slane %v1005, %v1009
      %v1013 = vsel %vm756, %v998, 0
      %1015 = vmatprep.subr.mxu0 0.0
      %1016 = vmatpush1.msra.mxu0 0.0
      %1017 = vmatprep.subr.mxu0 0.0
      %1018 = vmatpush1.msra.mxu0 0.0
      %1019 = vmatprep.subr.mxu0 0.0
      %1020 = vmatpush1.msra.mxu0 0.0
      %1021 = vmatprep.subr.mxu0 0.0
      %1022 = vmatpush1.msra.mxu0 0.0
      %1023 = vmatprep.subr.mxu0 0.0
      %1024 = vmatpush1.msra.mxu0 0.0
      %1025 = vmatprep.subr.mxu0 0.0
      %1026 = vmatpush1.msra.mxu0 0.0
      %1027 = vmatprep.subr.mxu0 0.0
      %1028 = vmatpush1.msra.mxu0 0.0
      %1029 = vmatprep.subr.mxu0 0.0
      %1030 = vmatpush1.msra.mxu0 0.0
      %1031 = vmatprep.subr.mxu0 0.0
      %1032 = vmatpush1.msra.mxu0 0.0
      %1033 = vmatprep.subr.mxu0 0.0
      %1034 = vmatpush1.msra.mxu0 0.0
      %1035 = vmatprep.subr.mxu0 0.0
      %1036 = vmatpush1.msra.mxu0 0.0
      %1037 = vmatprep.subr.mxu0 0.0
      %1038 = vmatpush1.msra.mxu0 0.0
      %1039 = vmatprep.subr.mxu0 0.0
      %1040 = vmatpush1.msra.mxu0 %v1004
      %1041 = vmatprep.subr.mxu0 0.0
      %1042 = vmatpush1.msra.mxu0 %v1003
      %1043 = vmatprep.subr.mxu0 0.0
      %1044 = vmatpush1.msra.mxu0 %v1002
      %1045 = vmatprep.subr.mxu0 0.0
      %1046 = vmatpush1.msra.mxu0 %v1001
      %1047 = vmatprep.subr.mxu0 0.0
      %1048 = vmatpush2.msra.mxu0 0.0
      %1049 = vmatprep.subr.mxu0 0.0
      %1050 = vmatpush2.msra.mxu0 0.0
      %1051 = vmatprep.subr.mxu0 0.0
      %1052 = vmatpush2.msra.mxu0 0.0
      %1053 = vmatprep.subr.mxu0 0.0
      %1054 = vmatpush2.msra.mxu0 0.0
      %1055 = vmatprep.subr.mxu0 0.0
      %1056 = vmatpush2.msra.mxu0 0.0
      %1057 = vmatprep.subr.mxu0 0.0
      %1058 = vmatpush2.msra.mxu0 0.0
      %1059 = vmatprep.subr.mxu0 0.0
      %1060 = vmatpush2.msra.mxu0 0.0
      %1061 = vmatprep.subr.mxu0 0.0
      %1062 = vmatpush2.msra.mxu0 0.0
      %1063 = vmatprep.subr.mxu0 0.0
      %1064 = vmatpush2.msra.mxu0 0.0
      %1065 = vmatprep.subr.mxu0 0.0
      %1066 = vmatpush2.msra.mxu0 0.0
      %1067 = vmatprep.subr.mxu0 0.0
      %1068 = vmatpush2.msra.mxu0 0.0
      %1069 = vmatprep.subr.mxu0 0.0
      %1070 = vmatpush2.msra.mxu0 0.0
      %1071 = vmatprep.subr.mxu0 0.0
      %1072 = vmatpush2.msra.mxu0 0.0
      %1073 = vmatprep.subr.mxu0 0.0
      %1074 = vmatpush2.msra.mxu0 0.0
      %1075 = vmatprep.subr.mxu0 0.0
      %1076 = vmatpush2.msra.mxu0 0.0
      %1077 = vmatprep.subr.mxu0 0.0
      %1078 = vmatpush2.msra.mxu0 0.0
      %1079 = vmatprep.mubr.f32.mxu0 0.0
      %1080 = vmatmul.mubr.f32.gmra.mxu0 %v1013
      %v1081 = vpop.f32.mrf.mxu0
      %v1082 = vadd.f32 %v1010, %v1081
      %v1083 = vpop.f32.mrf.mxu0
      %1084 = vdwg.mxu0
      %1085 = vst [vmem:[%s405] sm:$0xff] %v1082
      %p1086 = scmp.lt.s32.totalorder %s21, 3
      %s1087 = scalar_select %p1086, %s21, 3
      %s1088 = smul.addr %s1087, 8
      %s1089 = scalar_lea.vmem %s10, %s1088
      // Predicated region
      $region61: #{simple_gcn_forward.1} parent=59 // pred_check
        %p1090 = pneg %p269
      $region62: #{simple_gcn_forward.1} parent=59 // pred_check_branch
        %1092 = sbr.rel (%p1090) target = $region64
      $region63: #{simple_gcn_forward.1} parent=59 // pred_region
        _
      $region64: #{simple_gcn_forward.1} parent=59 // pred_fallthru
        _
    $region60: #{simple_gcn_forward.1} parent=5 // pred_fallthru
      _
    %p1093 = scmp.le.s32.totalorder 2, %s16
    // Predicated region
    $region65: #{simple_gcn_forward.1} parent=5 // pred_check
      %p1094 = pneg %p1093
    $region66: #{simple_gcn_forward.1} parent=5 // pred_check_branch
      %1096 = sbr.rel (%p1094) target = $region68
    $region67: #{simple_gcn_forward.1} parent=5 // pred_region
      %s1097 = ssub.s32 %s16, 2
      // Predicated region
      $region69: #{simple_gcn_forward.1} parent=67 // pred_check
        %p1098 = pneg %p275
      $region70: #{simple_gcn_forward.1} parent=67 // pred_check_branch
        %1100 = sbr.rel (%p1098) target = $region72
      $region71: #{simple_gcn_forward.1} parent=67 // pred_region
        %p1101 = scmp.lt.s32.totalorder %s22, 3
        %s1102 = scalar_select %p1101, %s22, 3
        %s1103 = smul.addr %s1102, 8
        %s1104 = scalar_lea.vmem %s10, %s1103
      $region72: #{simple_gcn_forward.1} parent=67 // pred_fallthru
        _
    $region68: #{simple_gcn_forward.1} parent=5 // pred_fallthru
      _
  $region6: #{simple_gcn_forward.1} parent=0 // loop_footer
    %s20 = sadd.s32 1, %s16
  $region7: #{simple_gcn_forward.1} parent=0 // loop_footer_branch
    %15 = sbr.rel target = $region3
  $region8: #{simple_gcn_forward.1} parent=0 // loop_exit
    _

</llo_original>
